<compile_context>
chip_gen: v5e
topology: v5e:2x2
jax: 0.10.0
libtpu: 0.0.40
codegen_flags: <defaults>
</compile_context>

<pallas_src>
import functools

import jax
import jax.numpy as jnp
from jax.experimental import pallas as pl
from jax.experimental.pallas import tpu as pltpu


def _round_up(a, b):
    return (a + b - 1) // b * b


_TK_CAP = 2048   # largest single reduction tile (collapses the K grid axis)
_TN_CAP = 512    # largest output-column tile
_TM_CAP = 256    # largest batch tile (multiple of 16 -> bf16 sublane packing)


def _pad_kn(K, N):
    """Padded weight dims: unpadded (full-extent block) when one tile covers the
    axis, otherwise rounded up to the 128-lane requirement."""
    Kp = K if K <= _TK_CAP else _round_up(K, 128)
    Np = N if N <= _TN_CAP else _round_up(N, 128)
    return Kp, Np


def _pick_tile(dim_p, cap, candidates):
    if dim_p <= cap:
        return dim_p                         # full-extent block, no tiling pad
    return next(c for c in candidates if dim_p % c == 0)   # 128 always divides


def _vmem_limit_bytes():
    # ~48 MiB is safe on every generation (v5e/v6e: 128 MiB physical, v7x: 64 MiB);
    # shrink if the runtime reports a smaller capacity.
    limit = 48 * 1024 * 1024
    try:
        phys = getattr(pltpu.get_tpu_info(), "vmem_capacity_bytes", None)
        if phys:
            limit = min(limit, int(phys) * 3 // 4)
    except Exception:
        pass
    return max(limit, 32 * 1024 * 1024)


def _linear_kernel_single_k(x_ref, w_ref, b_ref, o_ref):
    # Whole reduction in one tile: no accumulator scratch, no pl.when branches.
    x = x_ref[...].astype(w_ref.dtype)       # in-kernel cast (no-op if dtypes match)
    acc = jnp.dot(x, w_ref[...], preferred_element_type=jnp.float32)
    o_ref[...] = (acc + b_ref[...]).astype(o_ref.dtype)


def _linear_kernel_multi_k(x_ref, w_ref, b_ref, o_ref, acc_ref):
    k = pl.program_id(2)

    @pl.when(k == 0)
    def _():
        acc_ref[...] = jnp.zeros_like(acc_ref)

    x = x_ref[...].astype(w_ref.dtype)
    acc_ref[...] += jnp.dot(x, w_ref[...], preferred_element_type=jnp.float32)

    @pl.when(k == pl.num_programs(2) - 1)
    def _():
        o_ref[...] = (acc_ref[...] + b_ref[...]).astype(o_ref.dtype)


def prepare_params(weight_nk, bias, compute_dtype=jnp.bfloat16):
    """One-time parameter preparation (call OUTSIDE jit, once per model).

    weight_nk: PyTorch-layout weight (latent_dim, input_dim).
    Returns (w_padded, b_padded): w of shape (Kp, Np) in compute_dtype,
    bias of shape (1, Np) in f32.  Zero padding is reduction-safe.
    """
    weight_nk = jnp.asarray(weight_nk)
    bias = jnp.asarray(bias)
    N, K = weight_nk.shape
    Kp, Np = _pad_kn(K, N)
    w = weight_nk.T.astype(compute_dtype)              # (K, N), transposed once
    if (Kp, Np) != (K, N):
        w = jnp.pad(w, ((0, Kp - K), (0, Np - N)))
    b = bias.astype(jnp.float32).reshape(1, N)
    if Np != N:
        b = jnp.pad(b, ((0, 0), (0, Np - N)))
    return w, b


@functools.partial(jax.jit, static_argnames=("out_dim",))
def mlp_encoder_forward(x_nchw, w_padded, b_padded, *, out_dim=None):
    """out = x.reshape(B, -1) @ W^T + b with W pre-transposed/padded by prepare_params."""
    B = x_nchw.shape[0]
    x_flat = x_nchw.reshape(B, -1)                     # contiguous view, free
    K = x_flat.shape[1]
    Kp, Np = w_padded.shape
    assert K <= Kp, "input_dim does not match the prepared weight"
    compute_dtype = w_padded.dtype
    out_dtype = x_nchw.dtype
    n_out = Np if out_dim is None else out_dim

    # --- tile selection (never pads beyond what prepare_params already did) ---
    tk = _pick_tile(Kp, _TK_CAP, (2048, 1536, 1024, 768, 512, 384, 256, 128))
    tn = _pick_tile(Np, _TN_CAP, (512, 384, 256, 128))
    if B <= _TM_CAP:
        tm, Mp = B, B                                  # full-extent M block, no pad
    else:
        tm = _TM_CAP                                   # 256: multiple of 16 (bf16 packing)
        Mp = _round_up(B, tm)

    grid_m, grid_n, grid_k = Mp // tm, Np // tn, Kp // tk

    # v7x megacore: give a "parallel" axis >= 2 steps when legal, splitting the
    # axis whose re-read operand (x for N-splits, w for M-splits) is smaller.
    if grid_m == 1 and grid_n == 1:
        can_split_n = Np >= 256 and Np % 256 == 0
        can_split_m = Mp >= 16 and Mp % 16 == 0
        if can_split_n and (Mp <= Np or not can_split_m):
            tn = Np // 2
        elif can_split_m:
            tm = Mp // 2
        grid_m, grid_n = Mp // tm, Np // tn

    # --- activations: avoid extra HBM passes ---
    # Read exactly once (single N tile): keep original dtype, cast in-kernel.
    # Re-read across N tiles: pre-cast so each re-read streams half the bytes.
    x_p = x_flat
    if grid_n > 1 and x_p.dtype != compute_dtype:
        x_p = x_p.astype(compute_dtype)
    if (Mp, Kp) != (B, K):
        x_p = jnp.pad(x_p, ((0, Mp - B), (0, Kp - K)))

    x_item = jnp.dtype(x_p.dtype).itemsize
    w_item = jnp.dtype(compute_dtype).itemsize
    out_item = jnp.dtype(out_dtype).itemsize
    cost = pl.CostEstimate(
        flops=2 * Mp * Kp * Np,
        transcendentals=0,
        bytes_accessed=(grid_n * Mp * Kp * x_item      # x re-read per N tile
                        + grid_m * Kp * Np * w_item    # w re-read per M tile
                        + grid_m * Np * 4              # bias read per (i, j) tile
                        + Mp * Np * out_item),         # output writeback
    )
    compiler_params = pltpu.CompilerParams(
        dimension_semantics=(("parallel", "parallel") if grid_k == 1
                             else ("parallel", "parallel", "arbitrary")),
        vmem_limit_bytes=_vmem_limit_bytes(),
    )

    if grid_k == 1:
        kernel = _linear_kernel_single_k
        grid_spec = pltpu.PrefetchScalarGridSpec(
            num_scalar_prefetch=0,
            grid=(grid_m, grid_n),
            in_specs=[
                pl.BlockSpec((tm, Kp), lambda i, j: (i, 0)),
                pl.BlockSpec((Kp, tn), lambda i, j: (0, j)),
                pl.BlockSpec((1, tn), lambda i, j: (0, j)),
            ],
            out_specs=pl.BlockSpec((tm, tn), lambda i, j: (i, j)),
        )
    else:
        kernel = _linear_kernel_multi_k
        grid_spec = pltpu.PrefetchScalarGridSpec(
            num_scalar_prefetch=0,
            grid=(grid_m, grid_n, grid_k),
            in_specs=[
                pl.BlockSpec((tm, tk), lambda i, j, k: (i, k)),
                pl.BlockSpec((tk, tn), lambda i, j, k: (k, j)),
                pl.BlockSpec((1, tn), lambda i, j, k: (0, j)),
            ],
            out_specs=pl.BlockSpec((tm, tn), lambda i, j, k: (i, j)),
            scratch_shapes=[pltpu.VMEM((tm, tn), jnp.float32)],
        )

    # TODO(synk): optionally emit a bf16 output (cast on store) when downstream
    # tolerates it; kept at the input dtype to match torch.nn.Linear semantics.
    out_p = pl.pallas_call(
        kernel,
        out_shape=jax.ShapeDtypeStruct((Mp, Np), out_dtype),
        grid_spec=grid_spec,
        compiler_params=compiler_params,
        cost_estimate=cost,
    )(x_p, w_padded, b_padded)

    if (Mp, Np) != (B, n_out):
        out_p = out_p[:B, :n_out]
    return out_p


def init_params(key, input_dim, latent_dim):
    # Deterministic init mimicking nn.Linear's uniform(-1/sqrt(fan_in), 1/sqrt(fan_in)).
    # Weight kept in PyTorch layout (latent_dim, input_dim).
    kw, kb = jax.random.split(key)
    bound = 1.0 / jnp.sqrt(jnp.float32(input_dim))
    weight = jax.random.uniform(kw, (latent_dim, input_dim), jnp.float32,
                                minval=-bound, maxval=bound)
    bias = jax.random.uniform(kb, (latent_dim,), jnp.float32,
                              minval=-bound, maxval=bound)
    return weight, bias


if __name__ == "__main__":
    key = jax.random.PRNGKey(0)
    k_x, k_p = jax.random.split(key)

    # Small shapes: batch=2, channels=4, spatial=16x16 -> input_dim=1024, latent_dim=32
    B, C, H, W = 2, 4, 16, 16
    input_dim = C * H * W
    latent_dim = 32

    x = jax.random.normal(k_x, (B, C, H, W), jnp.float32)
    weight, bias = init_params(k_p, input_dim, latent_dim)     # PyTorch layout (N, K)

    # Plain-JAX reference of the PyTorch forward.
    ref = x.reshape(B, -1) @ weight.T + bias

    # bf16 compute (default deployment path): weight cast/pad done ONCE here.
    w_bf16, b_pad = prepare_params(weight, bias, compute_dtype=jnp.bfloat16)
    out_bf16 = jax.block_until_ready(
        mlp_encoder_forward(x, w_bf16, b_pad, out_dim=latent_dim))
    assert out_bf16.shape == (B, latent_dim)
    assert jnp.allclose(out_bf16, ref, atol=2e-2, rtol=2e-2)

    # f32 compute path: tight parity with the reference.
    w_f32, b_pad32 = prepare_params(weight, bias, compute_dtype=jnp.float32)
    out_f32 = jax.block_until_ready(
        mlp_encoder_forward(x, w_f32, b_pad32, out_dim=latent_dim))
    assert out_f32.shape == (B, latent_dim)
    assert jnp.allclose(out_f32, ref, atol=1e-4, rtol=1e-4)

    print("KERNEL_OK")
</pallas_src>

<mosaic_0001>
module attributes {stable_mosaic.version = 11 : i64} {
  func.func @_linear_kernel_single_k(%arg0: i32, %arg1: i32, %arg2: memref<2x1024xf32, #tpu.memory_space<vmem>>, %arg3: memref<1024x32xbf16, #tpu.memory_space<vmem>>, %arg4: memref<1x32xf32, #tpu.memory_space<vmem>>, %arg5: memref<2x32xf32, #tpu.memory_space<vmem>>) attributes {dimension_semantics = [#tpu.dimension_semantics<parallel>, #tpu.dimension_semantics<parallel>], iteration_bounds = array<i64: 1, 1>, scalar_prefetch = 0 : i64, scratch_operands = 0 : i64, tpu.core_type = #tpu.core_type<tc>, window_params = [{transform_indices = @transform_0, window_bounds = array<i64: 2, 1024>}, {transform_indices = @transform_1, window_bounds = array<i64: 1024, 32>}, {transform_indices = @transform_2, window_bounds = array<i64: 1, 32>}, {transform_indices = @transform_3, window_bounds = array<i64: 2, 32>}]} {
    %c0 = arith.constant 0 : index
    %c0_0 = arith.constant 0 : index
    %0 = vector.load %arg2[%c0, %c0_0] : memref<2x1024xf32, #tpu.memory_space<vmem>>, vector<2x1024xf32>
    %1 = arith.truncf %0 : vector<2x1024xf32> to vector<2x1024xbf16>
    %c0_1 = arith.constant 0 : index
    %c0_2 = arith.constant 0 : index
    %2 = vector.load %arg3[%c0_1, %c0_2] : memref<1024x32xbf16, #tpu.memory_space<vmem>>, vector<1024x32xbf16>
    %cst = arith.constant dense<0.000000e+00> : vector<2x32xf32>
    %3 = tpu.matmul %1, %2, %cst {dimension_numbers = #tpu.dot_dimension_numbers<[1], [0], [0], [1], [0, 0, 1, 1], [], []>} : vector<2x1024xbf16>, vector<1024x32xbf16>, vector<2x32xf32> -> vector<2x32xf32>
    %c0_3 = arith.constant 0 : index
    %c0_4 = arith.constant 0 : index
    %4 = vector.load %arg4[%c0_3, %c0_4] : memref<1x32xf32, #tpu.memory_space<vmem>>, vector<1x32xf32>
    %5 = vector.broadcast %4 : vector<1x32xf32> to vector<2x32xf32>
    %6 = arith.addf %3, %5 : vector<2x32xf32>
    %c0_5 = arith.constant 0 : index
    %c0_6 = arith.constant 0 : index
    %7 = vector.load %arg5[%c0_5, %c0_6] : memref<2x32xf32, #tpu.memory_space<vmem>>, vector<2x32xf32>
    tpu.vector_store %arg5[%c0_5, %c0_6], %6 {strides = array<i32>} : memref<2x32xf32, #tpu.memory_space<vmem>>, vector<2x32xf32>,
    return
  }
  func.func @transform_0(%arg0: i32, %arg1: i32) -> (i32, i32) {
    %c0_i32 = arith.constant 0 : i32
    %c0_i32_0 = arith.constant 0 : i32
    return %arg0, %c0_i32 : i32, i32
  }
  func.func @transform_1(%arg0: i32, %arg1: i32) -> (i32, i32) {
    %c0_i32 = arith.constant 0 : i32
    %c0_i32_0 = arith.constant 0 : i32
    return %c0_i32, %arg1 : i32, i32
  }
  func.func @transform_2(%arg0: i32, %arg1: i32) -> (i32, i32) {
    %c0_i32 = arith.constant 0 : i32
    %c0_i32_0 = arith.constant 0 : i32
    return %c0_i32, %arg1 : i32, i32
  }
  func.func @transform_3(%arg0: i32, %arg1: i32) -> (i32, i32) {
    %c0_i32 = arith.constant 0 : i32
    return %arg0, %arg1 : i32, i32
  }
}

</mosaic_0001>

<llo_original>
// kernel: mlp_encoder_forward.1
$region0: #{mlp_encoder_forward.1}
  #allocation0 [shape = 'u32[]', space=smem, size = 0x4, offset = 0x4, fixed_abs, tag = 'smem constant byte address 0x4 - core index']
  #allocation1 [shape = 'u32[72,128]{1,0:T(1,128)}', space=vmem, size = 0x9000, scoped, tag = 'internal scratch']
  %s0 = inlined_call_operand.vmem [shape: f32[2,1024], index: 0, kind: input, shape index: {}]
  %s1 = inlined_call_operand.vmem [shape: bf16[1024,32], index: 1, kind: input, shape index: {}]
  %s2 = inlined_call_operand.vmem [shape: f32[1,32], index: 2, kind: input, shape index: {}]
  %s3 = inlined_call_operand.hbm [shape: f32[2,32], index: 3, kind: output, shape index: {}]
  %s4 = sld [smem:[#allocation0]]
  $region22: #{mlp_encoder_forward.1} parent=0
    _
  %s6 = ssub.s32 1, %s4
  %s7 = scalar_select 0, %s6, %s4
  $region1: #{mlp_encoder_forward.1} parent=0
    #allocation2 [shape = 'u8[1024]{0}', space=vmem, size = 0x400, scoped, tag = 'output window, operand 0, single buffered']
    #allocation3 [shape = 's32[1]{0}', space=sflag, size = 0x4, scoped, tag = 'scoped memory for mlp_encoder_forward.1']
    %8 = vsyncpa [#allocation3], 0
    // Predicated region
    $region2: #{mlp_encoder_forward.1} parent=1 // pred_check
      _
    $region3: #{mlp_encoder_forward.1} parent=1 // pred_check_branch
      %10 = sbr.rel (0) target = $region5
    $region4: #{mlp_encoder_forward.1} parent=1 // pred_region
      _
    $region5: #{mlp_encoder_forward.1} parent=1 // pred_fallthru
      _
    // Predicated region
    $region6: #{mlp_encoder_forward.1} parent=1 // pred_check
      _
    $region7: #{mlp_encoder_forward.1} parent=1 // pred_check_branch
      %12 = sbr.rel (0) target = $region9
    $region8: #{mlp_encoder_forward.1} parent=1 // pred_region
      _
    $region9: #{mlp_encoder_forward.1} parent=1 // pred_fallthru
      _
    // Predicated region
    $region10: #{mlp_encoder_forward.1} parent=1 // pred_check
      _
    $region11: #{mlp_encoder_forward.1} parent=1 // pred_check_branch
      %14 = sbr.rel (0) target = $region13
    $region12: #{mlp_encoder_forward.1} parent=1 // pred_region
      _
    $region13: #{mlp_encoder_forward.1} parent=1 // pred_fallthru
      _
    %v15 = vld [vmem:[%s0] sm:$0xff]
    %v16 = vld [vmem:[%s0 + $0x8] sm:$0xff]
    %19 = vst [vmem:[#allocation1] ss:$4 sm:$0xff] %v15
    %s20 = scalar_lea.vmem [#allocation1], 32
    %21 = vst [vmem:[%s20] ss:$4 sm:$0xff] %v16
    %v22 = vld.sshfl [vmem:[#allocation1] sm:$0xff pattern:$0x73625140]
    %v23 = vld.sshfl [vmem:[#allocation1 + $0x8] sm:$0xff pattern:$0x73625140]
    %v24 = vld.sshfl [vmem:[#allocation1 + $0x10] sm:$0xff pattern:$0x73625140]
    %v25 = vld.sshfl [vmem:[#allocation1 + $0x18] sm:$0xff pattern:$0x73625140]
    %v26 = vld.sshfl [vmem:[#allocation1 + $0x20] sm:$0xff pattern:$0x73625140]
    %v27 = vld.sshfl [vmem:[#allocation1 + $0x28] sm:$0xff pattern:$0x73625140]
    %v28 = vld.sshfl [vmem:[#allocation1 + $0x30] sm:$0xff pattern:$0x73625140]
    %v29 = vld.sshfl [vmem:[#allocation1 + $0x38] sm:$0xff pattern:$0x73625140]
    %v38 = vpack.c.bf16 %v22, %v22
    %v39 = vpack.c.bf16 %v23, %v23
    %v40 = vpack.c.bf16 %v24, %v24
    %v41 = vpack.c.bf16 %v25, %v25
    %v42 = vpack.c.bf16 %v26, %v26
    %v43 = vpack.c.bf16 %v27, %v27
    %v44 = vpack.c.bf16 %v28, %v28
    %v45 = vpack.c.bf16 %v29, %v29
    %v46 = vld [vmem:[%s1] sm:$0xf]
    %v47 = vld [vmem:[%s1 + $0x4] sm:$0xf]
    %v48 = vld [vmem:[%s1 + $0x8] sm:$0xf]
    %v49 = vld [vmem:[%s1 + $0xc] sm:$0xf]
    %v50 = vld [vmem:[%s1 + $0x10] sm:$0xf]
    %v51 = vld [vmem:[%s1 + $0x14] sm:$0xf]
    %v52 = vld [vmem:[%s1 + $0x18] sm:$0xf]
    %v53 = vld [vmem:[%s1 + $0x1c] sm:$0xf]
    %v54 = vld [vmem:[%s1 + $0x20] sm:$0xf]
    %v55 = vld [vmem:[%s1 + $0x24] sm:$0xf]
    %v56 = vld [vmem:[%s1 + $0x28] sm:$0xf]
    %v57 = vld [vmem:[%s1 + $0x2c] sm:$0xf]
    %v58 = vld [vmem:[%s1 + $0x30] sm:$0xf]
    %v59 = vld [vmem:[%s1 + $0x34] sm:$0xf]
    %v60 = vld [vmem:[%s1 + $0x38] sm:$0xf]
    %v61 = vld [vmem:[%s1 + $0x3c] sm:$0xf]
    %v62 = vld [vmem:[%s1 + $0x40] sm:$0xf]
    %v63 = vld [vmem:[%s1 + $0x44] sm:$0xf]
    %v64 = vld [vmem:[%s1 + $0x48] sm:$0xf]
    %v65 = vld [vmem:[%s1 + $0x4c] sm:$0xf]
    %v66 = vld [vmem:[%s1 + $0x50] sm:$0xf]
    %v67 = vld [vmem:[%s1 + $0x54] sm:$0xf]
    %v68 = vld [vmem:[%s1 + $0x58] sm:$0xf]
    %v69 = vld [vmem:[%s1 + $0x5c] sm:$0xf]
    %v70 = vld [vmem:[%s1 + $0x60] sm:$0xf]
    %v71 = vld [vmem:[%s1 + $0x64] sm:$0xf]
    %v72 = vld [vmem:[%s1 + $0x68] sm:$0xf]
    %v73 = vld [vmem:[%s1 + $0x6c] sm:$0xf]
    %v74 = vld [vmem:[%s1 + $0x70] sm:$0xf]
    %v75 = vld [vmem:[%s1 + $0x74] sm:$0xf]
    %v76 = vld [vmem:[%s1 + $0x78] sm:$0xf]
    %v77 = vld [vmem:[%s1 + $0x7c] sm:$0xf]
    %v78 = vld [vmem:[%s1 + $0x80] sm:$0xf]
    %v79 = vld [vmem:[%s1 + $0x84] sm:$0xf]
    %v80 = vld [vmem:[%s1 + $0x88] sm:$0xf]
    %v81 = vld [vmem:[%s1 + $0x8c] sm:$0xf]
    %v82 = vld [vmem:[%s1 + $0x90] sm:$0xf]
    %v83 = vld [vmem:[%s1 + $0x94] sm:$0xf]
    %v84 = vld [vmem:[%s1 + $0x98] sm:$0xf]
    %v85 = vld [vmem:[%s1 + $0x9c] sm:$0xf]
    %v86 = vld [vmem:[%s1 + $0xa0] sm:$0xf]
    %v87 = vld [vmem:[%s1 + $0xa4] sm:$0xf]
    %v88 = vld [vmem:[%s1 + $0xa8] sm:$0xf]
    %v89 = vld [vmem:[%s1 + $0xac] sm:$0xf]
    %v90 = vld [vmem:[%s1 + $0xb0] sm:$0xf]
    %v91 = vld [vmem:[%s1 + $0xb4] sm:$0xf]
    %v92 = vld [vmem:[%s1 + $0xb8] sm:$0xf]
    %v93 = vld [vmem:[%s1 + $0xbc] sm:$0xf]
    %v94 = vld [vmem:[%s1 + $0xc0] sm:$0xf]
    %v95 = vld [vmem:[%s1 + $0xc4] sm:$0xf]
    %v96 = vld [vmem:[%s1 + $0xc8] sm:$0xf]
    %v97 = vld [vmem:[%s1 + $0xcc] sm:$0xf]
    %v98 = vld [vmem:[%s1 + $0xd0] sm:$0xf]
    %v99 = vld [vmem:[%s1 + $0xd4] sm:$0xf]
    %v100 = vld [vmem:[%s1 + $0xd8] sm:$0xf]
    %v101 = vld [vmem:[%s1 + $0xdc] sm:$0xf]
    %v102 = vld [vmem:[%s1 + $0xe0] sm:$0xf]
    %v103 = vld [vmem:[%s1 + $0xe4] sm:$0xf]
    %v104 = vld [vmem:[%s1 + $0xe8] sm:$0xf]
    %v105 = vld [vmem:[%s1 + $0xec] sm:$0xf]
    %v106 = vld [vmem:[%s1 + $0xf0] sm:$0xf]
    %v107 = vld [vmem:[%s1 + $0xf4] sm:$0xf]
    %v108 = vld [vmem:[%s1 + $0xf8] sm:$0xf]
    %v109 = vld [vmem:[%s1 + $0xfc] sm:$0xf]
    %v110 = vld [vmem:[%s1 + $0x100] sm:$0xf]
    %v111 = vld [vmem:[%s1 + $0x104] sm:$0xf]
    %v112 = vld [vmem:[%s1 + $0x108] sm:$0xf]
    %v113 = vld [vmem:[%s1 + $0x10c] sm:$0xf]
    %v114 = vld [vmem:[%s1 + $0x110] sm:$0xf]
    %v115 = vld [vmem:[%s1 + $0x114] sm:$0xf]
    %v116 = vld [vmem:[%s1 + $0x118] sm:$0xf]
    %v117 = vld [vmem:[%s1 + $0x11c] sm:$0xf]
    %v118 = vld [vmem:[%s1 + $0x120] sm:$0xf]
    %v119 = vld [vmem:[%s1 + $0x124] sm:$0xf]
    %v120 = vld [vmem:[%s1 + $0x128] sm:$0xf]
    %v121 = vld [vmem:[%s1 + $0x12c] sm:$0xf]
    %v122 = vld [vmem:[%s1 + $0x130] sm:$0xf]
    %v123 = vld [vmem:[%s1 + $0x134] sm:$0xf]
    %v124 = vld [vmem:[%s1 + $0x138] sm:$0xf]
    %v125 = vld [vmem:[%s1 + $0x13c] sm:$0xf]
    %v126 = vld [vmem:[%s1 + $0x140] sm:$0xf]
    %v127 = vld [vmem:[%s1 + $0x144] sm:$0xf]
    %v128 = vld [vmem:[%s1 + $0x148] sm:$0xf]
    %v129 = vld [vmem:[%s1 + $0x14c] sm:$0xf]
    %v130 = vld [vmem:[%s1 + $0x150] sm:$0xf]
    %v131 = vld [vmem:[%s1 + $0x154] sm:$0xf]
    %v132 = vld [vmem:[%s1 + $0x158] sm:$0xf]
    %v133 = vld [vmem:[%s1 + $0x15c] sm:$0xf]
    %v134 = vld [vmem:[%s1 + $0x160] sm:$0xf]
    %v135 = vld [vmem:[%s1 + $0x164] sm:$0xf]
    %v136 = vld [vmem:[%s1 + $0x168] sm:$0xf]
    %v137 = vld [vmem:[%s1 + $0x16c] sm:$0xf]
    %v138 = vld [vmem:[%s1 + $0x170] sm:$0xf]
    %v139 = vld [vmem:[%s1 + $0x174] sm:$0xf]
    %v140 = vld [vmem:[%s1 + $0x178] sm:$0xf]
    %v141 = vld [vmem:[%s1 + $0x17c] sm:$0xf]
    %v142 = vld [vmem:[%s1 + $0x180] sm:$0xf]
    %v143 = vld [vmem:[%s1 + $0x184] sm:$0xf]
    %v144 = vld [vmem:[%s1 + $0x188] sm:$0xf]
    %v145 = vld [vmem:[%s1 + $0x18c] sm:$0xf]
    %v146 = vld [vmem:[%s1 + $0x190] sm:$0xf]
    %v147 = vld [vmem:[%s1 + $0x194] sm:$0xf]
    %v148 = vld [vmem:[%s1 + $0x198] sm:$0xf]
    %v149 = vld [vmem:[%s1 + $0x19c] sm:$0xf]
    %v150 = vld [vmem:[%s1 + $0x1a0] sm:$0xf]
    %v151 = vld [vmem:[%s1 + $0x1a4] sm:$0xf]
    %v152 = vld [vmem:[%s1 + $0x1a8] sm:$0xf]
    %v153 = vld [vmem:[%s1 + $0x1ac] sm:$0xf]
    %v154 = vld [vmem:[%s1 + $0x1b0] sm:$0xf]
    %v155 = vld [vmem:[%s1 + $0x1b4] sm:$0xf]
    %v156 = vld [vmem:[%s1 + $0x1b8] sm:$0xf]
    %v157 = vld [vmem:[%s1 + $0x1bc] sm:$0xf]
    %v158 = vld [vmem:[%s1 + $0x1c0] sm:$0xf]
    %v159 = vld [vmem:[%s1 + $0x1c4] sm:$0xf]
    %v160 = vld [vmem:[%s1 + $0x1c8] sm:$0xf]
    %v161 = vld [vmem:[%s1 + $0x1cc] sm:$0xf]
    %v162 = vld [vmem:[%s1 + $0x1d0] sm:$0xf]
    %v163 = vld [vmem:[%s1 + $0x1d4] sm:$0xf]
    %v164 = vld [vmem:[%s1 + $0x1d8] sm:$0xf]
    %v165 = vld [vmem:[%s1 + $0x1dc] sm:$0xf]
    %v166 = vld [vmem:[%s1 + $0x1e0] sm:$0xf]
    %v167 = vld [vmem:[%s1 + $0x1e4] sm:$0xf]
    %v168 = vld [vmem:[%s1 + $0x1e8] sm:$0xf]
    %v169 = vld [vmem:[%s1 + $0x1ec] sm:$0xf]
    %v170 = vld [vmem:[%s1 + $0x1f0] sm:$0xf]
    %v171 = vld [vmem:[%s1 + $0x1f4] sm:$0xf]
    %v172 = vld [vmem:[%s1 + $0x1f8] sm:$0xf]
    %v173 = vld [vmem:[%s1 + $0x1fc] sm:$0xf]
    %v174 = vld [vmem:[%s2] sm:$0x1]
    %v176 = vperm.slane %v174, 0
    %v306 = vunpack.c.l.b16 %v46
    %v307 = vunpack.c.l.b16 %v47
    %v308 = vunpack.c.l.b16 %v48
    %v309 = vunpack.c.l.b16 %v49
    %v310 = vunpack.c.l.b16 %v50
    %v311 = vunpack.c.l.b16 %v51
    %v312 = vunpack.c.l.b16 %v52
    %v313 = vunpack.c.l.b16 %v53
    %v314 = vunpack.c.l.b16 %v54
    %v315 = vunpack.c.l.b16 %v55
    %v316 = vunpack.c.l.b16 %v56
    %v317 = vunpack.c.l.b16 %v57
    %v318 = vunpack.c.l.b16 %v58
    %v319 = vunpack.c.l.b16 %v59
    %v320 = vunpack.c.l.b16 %v60
    %v321 = vunpack.c.l.b16 %v61
    %v322 = vunpack.c.l.b16 %v62
    %v323 = vunpack.c.l.b16 %v63
    %v324 = vunpack.c.l.b16 %v64
    %v325 = vunpack.c.l.b16 %v65
    %v326 = vunpack.c.l.b16 %v66
    %v327 = vunpack.c.l.b16 %v67
    %v328 = vunpack.c.l.b16 %v68
    %v329 = vunpack.c.l.b16 %v69
    %v330 = vunpack.c.l.b16 %v70
    %v331 = vunpack.c.l.b16 %v71
    %v332 = vunpack.c.l.b16 %v72
    %v333 = vunpack.c.l.b16 %v73
    %v334 = vunpack.c.l.b16 %v74
    %v335 = vunpack.c.l.b16 %v75
    %v336 = vunpack.c.l.b16 %v76
    %v337 = vunpack.c.l.b16 %v77
    %v338 = vunpack.c.l.b16 %v78
    %v339 = vunpack.c.l.b16 %v79
    %v340 = vunpack.c.l.b16 %v80
    %v341 = vunpack.c.l.b16 %v81
    %v342 = vunpack.c.l.b16 %v82
    %v343 = vunpack.c.l.b16 %v83
    %v344 = vunpack.c.l.b16 %v84
    %v345 = vunpack.c.l.b16 %v85
    %v346 = vunpack.c.l.b16 %v86
    %v347 = vunpack.c.l.b16 %v87
    %v348 = vunpack.c.l.b16 %v88
    %v349 = vunpack.c.l.b16 %v89
    %v350 = vunpack.c.l.b16 %v90
    %v351 = vunpack.c.l.b16 %v91
    %v352 = vunpack.c.l.b16 %v92
    %v353 = vunpack.c.l.b16 %v93
    %v354 = vunpack.c.l.b16 %v94
    %v355 = vunpack.c.l.b16 %v95
    %v356 = vunpack.c.l.b16 %v96
    %v357 = vunpack.c.l.b16 %v97
    %v358 = vunpack.c.l.b16 %v98
    %v359 = vunpack.c.l.b16 %v99
    %v360 = vunpack.c.l.b16 %v100
    %v361 = vunpack.c.l.b16 %v101
    %v362 = vunpack.c.l.b16 %v102
    %v363 = vunpack.c.l.b16 %v103
    %v364 = vunpack.c.l.b16 %v104
    %v365 = vunpack.c.l.b16 %v105
    %v366 = vunpack.c.l.b16 %v106
    %v367 = vunpack.c.l.b16 %v107
    %v368 = vunpack.c.l.b16 %v108
    %v369 = vunpack.c.l.b16 %v109
    %v370 = vunpack.c.l.b16 %v110
    %v371 = vunpack.c.l.b16 %v111
    %v372 = vunpack.c.l.b16 %v112
    %v373 = vunpack.c.l.b16 %v113
    %v374 = vunpack.c.l.b16 %v114
    %v375 = vunpack.c.l.b16 %v115
    %v376 = vunpack.c.l.b16 %v116
    %v377 = vunpack.c.l.b16 %v117
    %v378 = vunpack.c.l.b16 %v118
    %v379 = vunpack.c.l.b16 %v119
    %v380 = vunpack.c.l.b16 %v120
    %v381 = vunpack.c.l.b16 %v121
    %v382 = vunpack.c.l.b16 %v122
    %v383 = vunpack.c.l.b16 %v123
    %v384 = vunpack.c.l.b16 %v124
    %v385 = vunpack.c.l.b16 %v125
    %v386 = vunpack.c.l.b16 %v126
    %v387 = vunpack.c.l.b16 %v127
    %v388 = vunpack.c.l.b16 %v128
    %v389 = vunpack.c.l.b16 %v129
    %v390 = vunpack.c.l.b16 %v130
    %v391 = vunpack.c.l.b16 %v131
    %v392 = vunpack.c.l.b16 %v132
    %v393 = vunpack.c.l.b16 %v133
    %v394 = vunpack.c.l.b16 %v134
    %v395 = vunpack.c.l.b16 %v135
    %v396 = vunpack.c.l.b16 %v136
    %v397 = vunpack.c.l.b16 %v137
    %v398 = vunpack.c.l.b16 %v138
    %v399 = vunpack.c.l.b16 %v139
    %v400 = vunpack.c.l.b16 %v140
    %v401 = vunpack.c.l.b16 %v141
    %v402 = vunpack.c.l.b16 %v142
    %v403 = vunpack.c.l.b16 %v143
    %v404 = vunpack.c.l.b16 %v144
    %v405 = vunpack.c.l.b16 %v145
    %v406 = vunpack.c.l.b16 %v146
    %v407 = vunpack.c.l.b16 %v147
    %v408 = vunpack.c.l.b16 %v148
    %v409 = vunpack.c.l.b16 %v149
    %v410 = vunpack.c.l.b16 %v150
    %v411 = vunpack.c.l.b16 %v151
    %v412 = vunpack.c.l.b16 %v152
    %v413 = vunpack.c.l.b16 %v153
    %v414 = vunpack.c.l.b16 %v154
    %v415 = vunpack.c.l.b16 %v155
    %v416 = vunpack.c.l.b16 %v156
    %v417 = vunpack.c.l.b16 %v157
    %v418 = vunpack.c.l.b16 %v158
    %v419 = vunpack.c.l.b16 %v159
    %v420 = vunpack.c.l.b16 %v160
    %v421 = vunpack.c.l.b16 %v161
    %v422 = vunpack.c.l.b16 %v162
    %v423 = vunpack.c.l.b16 %v163
    %v424 = vunpack.c.l.b16 %v164
    %v425 = vunpack.c.l.b16 %v165
    %v426 = vunpack.c.l.b16 %v166
    %v427 = vunpack.c.l.b16 %v167
    %v428 = vunpack.c.l.b16 %v168
    %v429 = vunpack.c.l.b16 %v169
    %v430 = vunpack.c.l.b16 %v170
    %v431 = vunpack.c.l.b16 %v171
    %v432 = vunpack.c.l.b16 %v172
    %v433 = vunpack.c.l.b16 %v173
    %v434 = vpack.c.b16 %v307, %v306
    %v435 = vpack.c.b16 %v309, %v308
    %v436 = vpack.c.b16 %v311, %v310
    %v437 = vpack.c.b16 %v313, %v312
    %v438 = vpack.c.b16 %v315, %v314
    %v439 = vpack.c.b16 %v317, %v316
    %v440 = vpack.c.b16 %v319, %v318
    %v441 = vpack.c.b16 %v321, %v320
    %v442 = vpack.c.b16 %v323, %v322
    %v443 = vpack.c.b16 %v325, %v324
    %v444 = vpack.c.b16 %v327, %v326
    %v445 = vpack.c.b16 %v329, %v328
    %v446 = vpack.c.b16 %v331, %v330
    %v447 = vpack.c.b16 %v333, %v332
    %v448 = vpack.c.b16 %v335, %v334
    %v449 = vpack.c.b16 %v337, %v336
    %v450 = vpack.c.b16 %v339, %v338
    %v451 = vpack.c.b16 %v341, %v340
    %v452 = vpack.c.b16 %v343, %v342
    %v453 = vpack.c.b16 %v345, %v344
    %v454 = vpack.c.b16 %v347, %v346
    %v455 = vpack.c.b16 %v349, %v348
    %v456 = vpack.c.b16 %v351, %v350
    %v457 = vpack.c.b16 %v353, %v352
    %v458 = vpack.c.b16 %v355, %v354
    %v459 = vpack.c.b16 %v357, %v356
    %v460 = vpack.c.b16 %v359, %v358
    %v461 = vpack.c.b16 %v361, %v360
    %v462 = vpack.c.b16 %v363, %v362
    %v463 = vpack.c.b16 %v365, %v364
    %v464 = vpack.c.b16 %v367, %v366
    %v465 = vpack.c.b16 %v369, %v368
    %v466 = vpack.c.b16 %v371, %v370
    %v467 = vpack.c.b16 %v373, %v372
    %v468 = vpack.c.b16 %v375, %v374
    %v469 = vpack.c.b16 %v377, %v376
    %v470 = vpack.c.b16 %v379, %v378
    %v471 = vpack.c.b16 %v381, %v380
    %v472 = vpack.c.b16 %v383, %v382
    %v473 = vpack.c.b16 %v385, %v384
    %v474 = vpack.c.b16 %v387, %v386
    %v475 = vpack.c.b16 %v389, %v388
    %v476 = vpack.c.b16 %v391, %v390
    %v477 = vpack.c.b16 %v393, %v392
    %v478 = vpack.c.b16 %v395, %v394
    %v479 = vpack.c.b16 %v397, %v396
    %v480 = vpack.c.b16 %v399, %v398
    %v481 = vpack.c.b16 %v401, %v400
    %v482 = vpack.c.b16 %v403, %v402
    %v483 = vpack.c.b16 %v405, %v404
    %v484 = vpack.c.b16 %v407, %v406
    %v485 = vpack.c.b16 %v409, %v408
    %v486 = vpack.c.b16 %v411, %v410
    %v487 = vpack.c.b16 %v413, %v412
    %v488 = vpack.c.b16 %v415, %v414
    %v489 = vpack.c.b16 %v417, %v416
    %v490 = vpack.c.b16 %v419, %v418
    %v491 = vpack.c.b16 %v421, %v420
    %v492 = vpack.c.b16 %v423, %v422
    %v493 = vpack.c.b16 %v425, %v424
    %v494 = vpack.c.b16 %v427, %v426
    %v495 = vpack.c.b16 %v429, %v428
    %v496 = vpack.c.b16 %v431, %v430
    %v497 = vpack.c.b16 %v433, %v432
    %562 = vmatpush.bf16.msra.mxu0 %v441
    %563 = vmatpush.bf16.msra.mxu0 %v440
    %564 = vmatpush.bf16.msra.mxu0 %v439
    %565 = vmatpush.bf16.msra.mxu0 %v438
    %566 = vmatpush.bf16.msra.mxu0 %v437
    %567 = vmatpush.bf16.msra.mxu0 %v436
    %568 = vmatpush.bf16.msra.mxu0 %v435
    %569 = vmatpush.bf16.msra.mxu0 %v434
    %570 = vmatmul.bf16.gmra.mxu0 %v38
    %v571 = vpop.f32.mrf.mxu0
    %v572 = vadd.f32 %v176, %v571
    %v573 = vpop.f32.mrf.mxu0
    %574 = vdwg.mxu0
    %575 = vmatpush.bf16.msra.mxu0 %v449
    %576 = vmatpush.bf16.msra.mxu0 %v448
    %577 = vmatpush.bf16.msra.mxu0 %v447
    %578 = vmatpush.bf16.msra.mxu0 %v446
    %579 = vmatpush.bf16.msra.mxu0 %v445
    %580 = vmatpush.bf16.msra.mxu0 %v444
    %581 = vmatpush.bf16.msra.mxu0 %v443
    %582 = vmatpush.bf16.msra.mxu0 %v442
    %583 = vmatmul.bf16.gmra.mxu0 %v39
    %v584 = vpop.f32.mrf.mxu0
    %v585 = vadd.f32 %v572, %v584
    %v586 = vpop.f32.mrf.mxu0
    %587 = vdwg.mxu0
    %588 = vmatpush.bf16.msra.mxu0 %v457
    %589 = vmatpush.bf16.msra.mxu0 %v456
    %590 = vmatpush.bf16.msra.mxu0 %v455
    %591 = vmatpush.bf16.msra.mxu0 %v454
    %592 = vmatpush.bf16.msra.mxu0 %v453
    %593 = vmatpush.bf16.msra.mxu0 %v452
    %594 = vmatpush.bf16.msra.mxu0 %v451
    %595 = vmatpush.bf16.msra.mxu0 %v450
    %596 = vmatmul.bf16.gmra.mxu0 %v40
    %v597 = vpop.f32.mrf.mxu0
    %v598 = vadd.f32 %v585, %v597
    %v599 = vpop.f32.mrf.mxu0
    %600 = vdwg.mxu0
    %601 = vmatpush.bf16.msra.mxu0 %v465
    %602 = vmatpush.bf16.msra.mxu0 %v464
    %603 = vmatpush.bf16.msra.mxu0 %v463
    %604 = vmatpush.bf16.msra.mxu0 %v462
    %605 = vmatpush.bf16.msra.mxu0 %v461
    %606 = vmatpush.bf16.msra.mxu0 %v460
    %607 = vmatpush.bf16.msra.mxu0 %v459
    %608 = vmatpush.bf16.msra.mxu0 %v458
    %609 = vmatmul.bf16.gmra.mxu0 %v41
    %v610 = vpop.f32.mrf.mxu0
    %v611 = vadd.f32 %v598, %v610
    %v612 = vpop.f32.mrf.mxu0
    %613 = vdwg.mxu0
    %614 = vmatpush.bf16.msra.mxu0 %v473
    %615 = vmatpush.bf16.msra.mxu0 %v472
    %616 = vmatpush.bf16.msra.mxu0 %v471
    %617 = vmatpush.bf16.msra.mxu0 %v470
    %618 = vmatpush.bf16.msra.mxu0 %v469
    %619 = vmatpush.bf16.msra.mxu0 %v468
    %620 = vmatpush.bf16.msra.mxu0 %v467
    %621 = vmatpush.bf16.msra.mxu0 %v466
    %622 = vmatmul.bf16.gmra.mxu0 %v42
    %v623 = vpop.f32.mrf.mxu0
    %v624 = vadd.f32 %v611, %v623
    %v625 = vpop.f32.mrf.mxu0
    %626 = vdwg.mxu0
    %627 = vmatpush.bf16.msra.mxu0 %v481
    %628 = vmatpush.bf16.msra.mxu0 %v480
    %629 = vmatpush.bf16.msra.mxu0 %v479
    %630 = vmatpush.bf16.msra.mxu0 %v478
    %631 = vmatpush.bf16.msra.mxu0 %v477
    %632 = vmatpush.bf16.msra.mxu0 %v476
    %633 = vmatpush.bf16.msra.mxu0 %v475
    %634 = vmatpush.bf16.msra.mxu0 %v474
    %635 = vmatmul.bf16.gmra.mxu0 %v43
    %v636 = vpop.f32.mrf.mxu0
    %v637 = vadd.f32 %v624, %v636
    %v638 = vpop.f32.mrf.mxu0
    %639 = vdwg.mxu0
    %640 = vmatpush.bf16.msra.mxu0 %v489
    %641 = vmatpush.bf16.msra.mxu0 %v488
    %642 = vmatpush.bf16.msra.mxu0 %v487
    %643 = vmatpush.bf16.msra.mxu0 %v486
    %644 = vmatpush.bf16.msra.mxu0 %v485
    %645 = vmatpush.bf16.msra.mxu0 %v484
    %646 = vmatpush.bf16.msra.mxu0 %v483
    %647 = vmatpush.bf16.msra.mxu0 %v482
    %648 = vmatmul.bf16.gmra.mxu0 %v44
    %v649 = vpop.f32.mrf.mxu0
    %v650 = vadd.f32 %v637, %v649
    %v651 = vpop.f32.mrf.mxu0
    %652 = vdwg.mxu0
    %653 = vmatpush.bf16.msra.mxu0 %v497
    %654 = vmatpush.bf16.msra.mxu0 %v496
    %655 = vmatpush.bf16.msra.mxu0 %v495
    %656 = vmatpush.bf16.msra.mxu0 %v494
    %657 = vmatpush.bf16.msra.mxu0 %v493
    %658 = vmatpush.bf16.msra.mxu0 %v492
    %659 = vmatpush.bf16.msra.mxu0 %v491
    %660 = vmatpush.bf16.msra.mxu0 %v490
    %661 = vmatmul.bf16.gmra.mxu0 %v45
    %v662 = vpop.f32.mrf.mxu0
    %v663 = vadd.f32 %v650, %v662
    %v664 = vpop.f32.mrf.mxu0
    %665 = vdwg.mxu0
    %vm666 = vcmask 254976
    %667 = vst.msk [vmem:[#allocation2] sm:$0x3] %vm666, %v663
    // Predicated region
    $region14: #{mlp_encoder_forward.1} parent=1 // pred_check
      _
    $region15: #{mlp_encoder_forward.1} parent=1 // pred_check_branch
      %669 = sbr.rel (0) target = $region17
    $region16: #{mlp_encoder_forward.1} parent=1 // pred_region
      %671 = vsyncadd [#allocation3], 0
      %s673 = sshll.u32 [#allocation2], 4
      %s674 = int_to_ptr.vmem [resolvable:$true] %s673
      %s675 = sshll.u32 %s3, 4
      %s676 = int_to_ptr.hbm [resolvable:$true] %s675
      %678 = dma.vmem_to_hbm [thread:$0]  %s674, 32, %s676, [#allocation3]
    $region17: #{mlp_encoder_forward.1} parent=1 // pred_fallthru
      _
    // Predicated region
    $region18: #{mlp_encoder_forward.1} parent=1 // pred_check
      _
    $region19: #{mlp_encoder_forward.1} parent=1 // pred_check_branch
      %680 = sbr.rel (0) target = $region21
    $region20: #{mlp_encoder_forward.1} parent=1 // pred_region
      %682 = dma.done [#allocation3], 32
    $region21: #{mlp_encoder_forward.1} parent=1 // pred_fallthru
      _
    %683 = vsyncpa [#allocation3], 1

</llo_original>
